<compile_context>
chip_gen: v6e
topology: v6e:2x2x1
jax: 0.10.0
libtpu: 0.0.40
codegen_flags: <defaults>
</compile_context>

<pallas_src>
import functools

import jax
import jax.numpy as jnp
from jax import lax
from jax.experimental import pallas as pl
from jax.experimental.pallas import tpu as pltpu


def _round_up(n, m):
    return (n + m - 1) // m * m


def _cdiv(a, b):
    return (a + b - 1) // b


def _default_elementwise_dtype():
    """bf16 VPU/EUP exists on v6e/v7x; v5e and older keep f32 elementwise."""
    try:
        kind = jax.devices()[0].device_kind.lower()
    except Exception:
        kind = ""
    if "v6" in kind or "v7" in kind:
        return jnp.bfloat16
    return jnp.float32


def _caenet_kernel(n_layers, mm_dtype, ew_dtype, x_ref, w_ref, b_ref, out_ref):
    """x_ref: (bt, P); w_ref: (L, P, P) mm_dtype; b_ref: (L, P, 1) f32; out_ref: (bt, P)."""
    xt = x_ref[...].astype(mm_dtype)                        # (bt, P)
    # Layer 0: fold the batch<->feature transpose into the MXU contraction
    # (out,in) . (bt,in)^T -> (out, bt), so activations sit batch-on-lanes
    # (lane-dense) for every subsequent matmul / bias-add / tanh.
    acc = lax.dot_general(w_ref[0], xt, (((1,), (1,)), ((), ())),
                          preferred_element_type=jnp.float32)   # (P, bt) f32
    h = jnp.tanh((acc + b_ref[0]).astype(ew_dtype))
    for i in range(1, n_layers):                             # tiny L -> unrolled
        acc = jnp.dot(w_ref[i], h.astype(mm_dtype),
                      preferred_element_type=jnp.float32)    # MXU, f32 accumulate
        h = jnp.tanh((acc + b_ref[i]).astype(ew_dtype))
    # Single in-kernel transpose back to batch-major (XLU work, hidden under
    # the output DMA) so the wrapper never relayouts the result in HBM.
    out_ref[...] = h.astype(jnp.float32).T.astype(out_ref.dtype)


def pack_params(weights, biases, compute_dtype=jnp.bfloat16):
    """weights[i]: (out, in) torch layout; biases[i]: (out,).

    Zero-pads every layer into a common (P, P) slab so two packed operands
    carry the whole network (stay VMEM-resident across the batch grid).
    Zero padding keeps the math exact: padded W columns kill padded activation
    rows, padded W rows + zero biases keep padded rows exactly zero.
    """
    dims = [w.shape[1] for w in weights] + [w.shape[0] for w in weights]
    P = _round_up(max(dims), 8)          # keep P=32 here; do NOT pad to 128
    L = len(weights)
    w_packed = jnp.zeros((L, P, P), compute_dtype)
    b_packed = jnp.zeros((L, P, 1), jnp.float32)
    for i, (w, b) in enumerate(zip(weights, biases)):
        o, n = w.shape
        w_packed = w_packed.at[i, :o, :n].set(w.astype(compute_dtype))
        b_packed = b_packed.at[i, :o, 0].set(b.astype(jnp.float32))
    return w_packed, b_packed, P


def _choose_batch_tile(B, b_tile):
    """Batch tile: multiple of 128 lanes, large (amortize per-step overhead),
    and giving >= 2 grid steps so a parallel batch axis feeds both v7x cores."""
    B128 = _round_up(B, 128)
    if B128 <= 128:
        return 128, 128
    bt = min(_round_up(b_tile, 128), _round_up(_cdiv(B128, 2), 128))
    return bt, _round_up(B, bt)


def caenet_forward(x, weights, biases, *, b_tile=8192,
                   compute_dtype=jnp.bfloat16, elementwise_dtype=None):
    """x: (B, D_in) native layout.  weights/biases: encoder layers then decoder.

    compute_dtype=jnp.float32 gives full parity with the f32 torch module
    (at reduced MXU rate); bf16 is the fast default.
    """
    if elementwise_dtype is None:
        elementwise_dtype = _default_elementwise_dtype()
    B, d_in = x.shape
    d_out = weights[-1].shape[0]
    L = len(weights)

    w_packed, b_packed, P = pack_params(weights, biases, compute_dtype)
    bt, B_pad = _choose_batch_tile(B, b_tile)

    # Input stays in the module's native (batch, features) layout: no wrapper
    # transpose pass.  Pad (and drop to the bf16 I/O dtype) only when needed.
    need_pad = (d_in != P) or (B != B_pad)
    if need_pad:
        x_in = jnp.pad(x.astype(compute_dtype),
                       ((0, B_pad - B), (0, P - d_in)))
    else:
        x_in = x                       # fed as-is; kernel casts tiles for MXU

    # Output also stays batch-major.  Use the bf16 I/O dtype when a wrapper
    # slice pass exists anyway (halves write traffic); otherwise keep the
    # caller's dtype so no wrapper pass is needed at all.
    need_slice = (d_out != P) or (B != B_pad)
    out_dtype = compute_dtype if need_slice else x.dtype

    flops = int(2 * B_pad * sum(w.shape[0] * w.shape[1] for w in weights))
    transcendentals = int(B_pad * sum(w.shape[0] for w in weights))
    bytes_accessed = int(P * B_pad * (jnp.dtype(x_in.dtype).itemsize
                                      + jnp.dtype(out_dtype).itemsize)
                         + L * P * P * jnp.dtype(compute_dtype).itemsize
                         + 4 * L * P)

    kernel = functools.partial(_caenet_kernel, L, compute_dtype,
                               elementwise_dtype)
    grid = (B_pad // bt,)

    out = pl.pallas_call(
        kernel,
        out_shape=jax.ShapeDtypeStruct((B_pad, P), out_dtype),
        grid_spec=pltpu.PrefetchScalarGridSpec(
            num_scalar_prefetch=0,
            grid=grid,
            in_specs=[
                # activations: tiled along batch, double-buffered by pipeline
                pl.BlockSpec((bt, P), lambda i: (i, 0)),
                # packed params: full blocks, VMEM-resident across grid steps
                pl.BlockSpec((L, P, P), lambda i: (0, 0, 0)),
                pl.BlockSpec((L, P, 1), lambda i: (0, 0, 0)),
            ],
            out_specs=pl.BlockSpec((bt, P), lambda i: (i, 0)),
        ),
        compiler_params=pltpu.CompilerParams(
            dimension_semantics=("parallel",)),      # v7x: both TCs split batch
        cost_estimate=pl.CostEstimate(flops=flops,
                                      transcendentals=transcendentals,
                                      bytes_accessed=bytes_accessed),
    )(x_in, w_packed, b_packed)

    if need_slice:
        out = out[:B, :d_out]
    return out.astype(x.dtype)


def make_mlp_params(key, dims):
    """dims = [d0,...,dn]; torch-layout W_i: (d_{i+1}, d_i), b_i: (d_{i+1},)."""
    weights, biases = [], []
    for i in range(len(dims) - 1):
        key, kw, kb = jax.random.split(key, 3)
        bound = 1.0 / (dims[i] ** 0.5)       # torch.nn.Linear default init range
        w = jax.random.uniform(kw, (dims[i + 1], dims[i]), jnp.float32, -bound, bound)
        b = jax.random.uniform(kb, (dims[i + 1],), jnp.float32, -bound, bound)
        weights.append(w)
        biases.append(b)
    return weights, biases, key


def reference_forward(x, weights, biases, *, matmul_dtype=jnp.bfloat16,
                      elementwise_dtype=jnp.float32):
    """Pure-JAX reference mirroring the kernel's dtype policy.

    tanh after EVERY layer (hidden, latent and final) matches the torch MLPs
    built with final_activation=torch.nn.Tanh.
    """
    h = x.T.astype(jnp.float32)              # (D_in, B)
    for w, b in zip(weights, biases):
        acc = jnp.dot(w.astype(matmul_dtype), h.astype(matmul_dtype),
                      preferred_element_type=jnp.float32)
        h = jnp.tanh((acc + b.astype(jnp.float32)[:, None])
                     .astype(elementwise_dtype)).astype(jnp.float32)
    return h.T


if __name__ == "__main__":
    # Shapes consistent with the module: batch=8, n_input_dims=32,
    # n_latent_dims=8, n_hidden_layers=2, n_units_per_layer=32.
    B, D_IN, D_LAT, H, N_HIDDEN = 8, 32, 8, 32, 2

    key = jax.random.PRNGKey(0)
    key, kx = jax.random.split(key)
    x = jax.random.normal(kx, (B, D_IN), jnp.float32)

    enc_dims = [D_IN] + [H] * N_HIDDEN + [D_LAT]
    dec_dims = [D_LAT] + [H] * N_HIDDEN + [D_IN]
    enc_w, enc_b, key = make_mlp_params(key, enc_dims)
    dec_w, dec_b, key = make_mlp_params(key, dec_dims)
    weights = enc_w + dec_w            # forward = decode(encode(x))
    biases = enc_b + dec_b

    ew_dtype = _default_elementwise_dtype()
    fwd = jax.jit(caenet_forward)

    # Module-sized batch (B=8): single 128-lane tile, pad/slice path.
    # (At this size wall time is launch + one pipeline step; batch multiple
    # calls before the kernel if B=8 matters in production.)
    x_hat = fwd(x, weights, biases)
    jax.block_until_ready(x_hat)
    assert x_hat.shape == (B, D_IN)

    ref_matched = reference_forward(x, weights, biases,
                                    matmul_dtype=jnp.bfloat16,
                                    elementwise_dtype=ew_dtype)
    assert jnp.allclose(x_hat, ref_matched, atol=2e-2, rtol=2e-2), \
        "mismatch vs matched-dtype reference"
    ref_f32 = reference_forward(x, weights, biases,
                                matmul_dtype=jnp.float32,
                                elementwise_dtype=jnp.float32)
    assert jnp.allclose(x_hat, ref_f32, atol=8e-2, rtol=8e-2), \
        "mismatch vs f32 reference"

    # Larger batch: exercises the >=2-step parallel grid (both v7x cores) and
    # the no-pad / no-slice fast path (x fed natively, no wrapper passes).
    B2 = 512
    key, kx2 = jax.random.split(key)
    x2 = jax.random.normal(kx2, (B2, D_IN), jnp.float32)
    x2_hat = fwd(x2, weights, biases)
    jax.block_until_ready(x2_hat)
    assert x2_hat.shape == (B2, D_IN)
    ref2 = reference_forward(x2, weights, biases,
                             matmul_dtype=jnp.bfloat16,
                             elementwise_dtype=ew_dtype)
    assert jnp.allclose(x2_hat, ref2, atol=2e-2, rtol=2e-2), \
        "mismatch vs matched-dtype reference (B=512)"

    print("KERNEL_OK")
</pallas_src>

<mosaic_0001>
module attributes {stable_mosaic.version = 11 : i64} {
  func.func @_caenet_kernel(%arg0: i32, %arg1: memref<128x32xbf16, #tpu.memory_space<vmem>>, %arg2: memref<6x32x32xbf16, #tpu.memory_space<vmem>>, %arg3: memref<6x32x1xf32, #tpu.memory_space<vmem>>, %arg4: memref<128x32xbf16, #tpu.memory_space<vmem>>) attributes {dimension_semantics = [#tpu.dimension_semantics<parallel>], iteration_bounds = array<i64: 1>, scalar_prefetch = 0 : i64, scratch_operands = 0 : i64, tpu.core_type = #tpu.core_type<tc>, window_params = [{transform_indices = @transform_0, window_bounds = array<i64: 128, 32>}, {pipeline_mode = #tpu.pipeline_mode<synchronous>, transform_indices = @transform_1, window_bounds = array<i64: 6, 32, 32>}, {pipeline_mode = #tpu.pipeline_mode<synchronous>, transform_indices = @transform_2, window_bounds = array<i64: 6, 32, 1>}, {transform_indices = @transform_3, window_bounds = array<i64: 128, 32>}]} {
    %c0 = arith.constant 0 : index
    %c0_0 = arith.constant 0 : index
    %0 = vector.load %arg1[%c0, %c0_0] : memref<128x32xbf16, #tpu.memory_space<vmem>>, vector<128x32xbf16>
    %c0_1 = arith.constant 0 : index
    %c0_2 = arith.constant 0 : index
    %c0_3 = arith.constant 0 : index
    %1 = vector.load %arg2[%c0_1, %c0_2, %c0_3] : memref<6x32x32xbf16, #tpu.memory_space<vmem>>, vector<1x32x32xbf16>
    %2 = vector.shape_cast %1 : vector<1x32x32xbf16> to vector<32x32xbf16>
    %cst = arith.constant dense<0.000000e+00> : vector<32x128xf32>
    %3 = tpu.matmul %2, %0, %cst {dimension_numbers = #tpu.dot_dimension_numbers<[1], [1], [0], [0], [0, 0, 1, 0], [], []>} : vector<32x32xbf16>, vector<128x32xbf16>, vector<32x128xf32> -> vector<32x128xf32>
    %c0_4 = arith.constant 0 : index
    %c0_5 = arith.constant 0 : index
    %c0_6 = arith.constant 0 : index
    %4 = vector.load %arg3[%c0_4, %c0_5, %c0_6] : memref<6x32x1xf32, #tpu.memory_space<vmem>>, vector<1x32x1xf32>
    %5 = vector.shape_cast %4 : vector<1x32x1xf32> to vector<32x1xf32>
    %6 = vector.broadcast %5 : vector<32x1xf32> to vector<32x128xf32>
    %7 = arith.addf %3, %6 : vector<32x128xf32>
    %8 = math.tanh %7 : vector<32x128xf32>
    %c1 = arith.constant 1 : index
    %c0_7 = arith.constant 0 : index
    %c0_8 = arith.constant 0 : index
    %9 = vector.load %arg2[%c1, %c0_7, %c0_8] : memref<6x32x32xbf16, #tpu.memory_space<vmem>>, vector<1x32x32xbf16>
    %10 = vector.shape_cast %9 : vector<1x32x32xbf16> to vector<32x32xbf16>
    %11 = arith.truncf %8 : vector<32x128xf32> to vector<32x128xbf16>
    %cst_9 = arith.constant dense<0.000000e+00> : vector<32x128xf32>
    %12 = tpu.matmul %10, %11, %cst_9 {dimension_numbers = #tpu.dot_dimension_numbers<[1], [0], [0], [1], [0, 0, 1, 1], [], []>} : vector<32x32xbf16>, vector<32x128xbf16>, vector<32x128xf32> -> vector<32x128xf32>
    %c1_10 = arith.constant 1 : index
    %c0_11 = arith.constant 0 : index
    %c0_12 = arith.constant 0 : index
    %13 = vector.load %arg3[%c1_10, %c0_11, %c0_12] : memref<6x32x1xf32, #tpu.memory_space<vmem>>, vector<1x32x1xf32>
    %14 = vector.shape_cast %13 : vector<1x32x1xf32> to vector<32x1xf32>
    %15 = vector.broadcast %14 : vector<32x1xf32> to vector<32x128xf32>
    %16 = arith.addf %12, %15 : vector<32x128xf32>
    %17 = math.tanh %16 : vector<32x128xf32>
    %c2 = arith.constant 2 : index
    %c0_13 = arith.constant 0 : index
    %c0_14 = arith.constant 0 : index
    %18 = vector.load %arg2[%c2, %c0_13, %c0_14] : memref<6x32x32xbf16, #tpu.memory_space<vmem>>, vector<1x32x32xbf16>
    %19 = vector.shape_cast %18 : vector<1x32x32xbf16> to vector<32x32xbf16>
    %20 = arith.truncf %17 : vector<32x128xf32> to vector<32x128xbf16>
    %cst_15 = arith.constant dense<0.000000e+00> : vector<32x128xf32>
    %21 = tpu.matmul %19, %20, %cst_15 {dimension_numbers = #tpu.dot_dimension_numbers<[1], [0], [0], [1], [0, 0, 1, 1], [], []>} : vector<32x32xbf16>, vector<32x128xbf16>, vector<32x128xf32> -> vector<32x128xf32>
    %c2_16 = arith.constant 2 : index
    %c0_17 = arith.constant 0 : index
    %c0_18 = arith.constant 0 : index
    %22 = vector.load %arg3[%c2_16, %c0_17, %c0_18] : memref<6x32x1xf32, #tpu.memory_space<vmem>>, vector<1x32x1xf32>
    %23 = vector.shape_cast %22 : vector<1x32x1xf32> to vector<32x1xf32>
    %24 = vector.broadcast %23 : vector<32x1xf32> to vector<32x128xf32>
    %25 = arith.addf %21, %24 : vector<32x128xf32>
    %26 = math.tanh %25 : vector<32x128xf32>
    %c3 = arith.constant 3 : index
    %c0_19 = arith.constant 0 : index
    %c0_20 = arith.constant 0 : index
    %27 = vector.load %arg2[%c3, %c0_19, %c0_20] : memref<6x32x32xbf16, #tpu.memory_space<vmem>>, vector<1x32x32xbf16>
    %28 = vector.shape_cast %27 : vector<1x32x32xbf16> to vector<32x32xbf16>
    %29 = arith.truncf %26 : vector<32x128xf32> to vector<32x128xbf16>
    %cst_21 = arith.constant dense<0.000000e+00> : vector<32x128xf32>
    %30 = tpu.matmul %28, %29, %cst_21 {dimension_numbers = #tpu.dot_dimension_numbers<[1], [0], [0], [1], [0, 0, 1, 1], [], []>} : vector<32x32xbf16>, vector<32x128xbf16>, vector<32x128xf32> -> vector<32x128xf32>
    %c3_22 = arith.constant 3 : index
    %c0_23 = arith.constant 0 : index
    %c0_24 = arith.constant 0 : index
    %31 = vector.load %arg3[%c3_22, %c0_23, %c0_24] : memref<6x32x1xf32, #tpu.memory_space<vmem>>, vector<1x32x1xf32>
    %32 = vector.shape_cast %31 : vector<1x32x1xf32> to vector<32x1xf32>
    %33 = vector.broadcast %32 : vector<32x1xf32> to vector<32x128xf32>
    %34 = arith.addf %30, %33 : vector<32x128xf32>
    %35 = math.tanh %34 : vector<32x128xf32>
    %c4 = arith.constant 4 : index
    %c0_25 = arith.constant 0 : index
    %c0_26 = arith.constant 0 : index
    %36 = vector.load %arg2[%c4, %c0_25, %c0_26] : memref<6x32x32xbf16, #tpu.memory_space<vmem>>, vector<1x32x32xbf16>
    %37 = vector.shape_cast %36 : vector<1x32x32xbf16> to vector<32x32xbf16>
    %38 = arith.truncf %35 : vector<32x128xf32> to vector<32x128xbf16>
    %cst_27 = arith.constant dense<0.000000e+00> : vector<32x128xf32>
    %39 = tpu.matmul %37, %38, %cst_27 {dimension_numbers = #tpu.dot_dimension_numbers<[1], [0], [0], [1], [0, 0, 1, 1], [], []>} : vector<32x32xbf16>, vector<32x128xbf16>, vector<32x128xf32> -> vector<32x128xf32>
    %c4_28 = arith.constant 4 : index
    %c0_29 = arith.constant 0 : index
    %c0_30 = arith.constant 0 : index
    %40 = vector.load %arg3[%c4_28, %c0_29, %c0_30] : memref<6x32x1xf32, #tpu.memory_space<vmem>>, vector<1x32x1xf32>
    %41 = vector.shape_cast %40 : vector<1x32x1xf32> to vector<32x1xf32>
    %42 = vector.broadcast %41 : vector<32x1xf32> to vector<32x128xf32>
    %43 = arith.addf %39, %42 : vector<32x128xf32>
    %44 = math.tanh %43 : vector<32x128xf32>
    %c5 = arith.constant 5 : index
    %c0_31 = arith.constant 0 : index
    %c0_32 = arith.constant 0 : index
    %45 = vector.load %arg2[%c5, %c0_31, %c0_32] : memref<6x32x32xbf16, #tpu.memory_space<vmem>>, vector<1x32x32xbf16>
    %46 = vector.shape_cast %45 : vector<1x32x32xbf16> to vector<32x32xbf16>
    %47 = arith.truncf %44 : vector<32x128xf32> to vector<32x128xbf16>
    %cst_33 = arith.constant dense<0.000000e+00> : vector<32x128xf32>
    %48 = tpu.matmul %46, %47, %cst_33 {dimension_numbers = #tpu.dot_dimension_numbers<[1], [0], [0], [1], [0, 0, 1, 1], [], []>} : vector<32x32xbf16>, vector<32x128xbf16>, vector<32x128xf32> -> vector<32x128xf32>
    %c5_34 = arith.constant 5 : index
    %c0_35 = arith.constant 0 : index
    %c0_36 = arith.constant 0 : index
    %49 = vector.load %arg3[%c5_34, %c0_35, %c0_36] : memref<6x32x1xf32, #tpu.memory_space<vmem>>, vector<1x32x1xf32>
    %50 = vector.shape_cast %49 : vector<1x32x1xf32> to vector<32x1xf32>
    %51 = vector.broadcast %50 : vector<32x1xf32> to vector<32x128xf32>
    %52 = arith.addf %48, %51 : vector<32x128xf32>
    %53 = math.tanh %52 : vector<32x128xf32>
    %54 = tpu.transpose %53, [1, 0] : vector<32x128xf32> -> vector<128x32xf32>
    %55 = arith.truncf %54 : vector<128x32xf32> to vector<128x32xbf16>
    %c0_37 = arith.constant 0 : index
    %c0_38 = arith.constant 0 : index
    %56 = vector.load %arg4[%c0_37, %c0_38] : memref<128x32xbf16, #tpu.memory_space<vmem>>, vector<128x32xbf16>
    tpu.vector_store %arg4[%c0_37, %c0_38], %55 {strides = array<i32>} : memref<128x32xbf16, #tpu.memory_space<vmem>>, vector<128x32xbf16>,
    return
  }
  func.func @transform_0(%arg0: i32) -> (i32, i32) {
    %c0_i32 = arith.constant 0 : i32
    %c0_i32_0 = arith.constant 0 : i32
    return %arg0, %c0_i32 : i32, i32
  }
  func.func @transform_1(%arg0: i32) -> (i32, i32, i32) {
    %c0_i32 = arith.constant 0 : i32
    %c0_i32_0 = arith.constant 0 : i32
    %c0_i32_1 = arith.constant 0 : i32
    %c0_i32_2 = arith.constant 0 : i32
    return %c0_i32, %c0_i32_0, %c0_i32_1 : i32, i32, i32
  }
  func.func @transform_2(%arg0: i32) -> (i32, i32, i32) {
    %c0_i32 = arith.constant 0 : i32
    %c0_i32_0 = arith.constant 0 : i32
    %c0_i32_1 = arith.constant 0 : i32
    %c0_i32_2 = arith.constant 0 : i32
    return %c0_i32, %c0_i32_0, %c0_i32_1 : i32, i32, i32
  }
  func.func @transform_3(%arg0: i32) -> (i32, i32) {
    %c0_i32 = arith.constant 0 : i32
    %c0_i32_0 = arith.constant 0 : i32
    return %arg0, %c0_i32 : i32, i32
  }
}

</mosaic_0001>

<llo_original>
// kernel: caenet_forward.1
$region0: #{caenet_forward.1}
  #allocation0 [shape = 'u32[]', space=smem, size = 0x4, offset = 0x4, fixed_abs, tag = 'smem constant byte address 0x4 - core index']
  #allocation1 [shape = 'u32[144,128]{1,0:T(1,128)}', space=vmem, size = 0x12000, scoped, tag = 'internal scratch']
  %s0 = inlined_call_operand.vmem [shape: bf16[128,32], index: 0, kind: input, shape index: {}]
  %s1 = inlined_call_operand.vmem [shape: bf16[6,32,32], index: 1, kind: input, shape index: {}]
  %s2 = inlined_call_operand.vmem [shape: f32[6,32,1], index: 2, kind: input, shape index: {}]
  %s3 = inlined_call_operand.vmem [shape: bf16[128,32], index: 3, kind: output, shape index: {}]
  %s4 = sld [smem:[#allocation0]]
  $region22: #{caenet_forward.1} parent=0
    _
  %s6 = ssub.s32 1, %s4
  %s7 = scalar_select 0, %s6, %s4
  // Predicated region
  $region2: #{caenet_forward.1} parent=0 // pred_check
    _
  $region3: #{caenet_forward.1} parent=0 // pred_check_branch
    %9 = sbr.rel (0) target = $region5
  $region4: #{caenet_forward.1} parent=0 // pred_region
    _
  $region5: #{caenet_forward.1} parent=0 // pred_fallthru
    _
  // Predicated region
  $region6: #{caenet_forward.1} parent=0 // pred_check
    _
  $region7: #{caenet_forward.1} parent=0 // pred_check_branch
    %11 = sbr.rel (0) target = $region9
  $region8: #{caenet_forward.1} parent=0 // pred_region
    _
  $region9: #{caenet_forward.1} parent=0 // pred_fallthru
    _
  // Predicated region
  $region10: #{caenet_forward.1} parent=0 // pred_check
    _
  $region11: #{caenet_forward.1} parent=0 // pred_check_branch
    %13 = sbr.rel (0) target = $region13
  $region12: #{caenet_forward.1} parent=0 // pred_region
    _
  $region13: #{caenet_forward.1} parent=0 // pred_fallthru
    _
  %v15 = vld [vmem:[%s0] sm:$0xf]
  %v16 = vld [vmem:[%s0 + $0x4] sm:$0xf]
  %v17 = vld [vmem:[%s0 + $0x8] sm:$0xf]
  %v18 = vld [vmem:[%s0 + $0xc] sm:$0xf]
  %v19 = vld [vmem:[%s0 + $0x10] sm:$0xf]
  %v20 = vld [vmem:[%s0 + $0x14] sm:$0xf]
  %v21 = vld [vmem:[%s0 + $0x18] sm:$0xf]
  %v22 = vld [vmem:[%s0 + $0x1c] sm:$0xf]
  %v23 = vld [vmem:[%s0 + $0x20] sm:$0xf]
  %v24 = vld [vmem:[%s0 + $0x24] sm:$0xf]
  %v25 = vld [vmem:[%s0 + $0x28] sm:$0xf]
  %v26 = vld [vmem:[%s0 + $0x2c] sm:$0xf]
  %v27 = vld [vmem:[%s0 + $0x30] sm:$0xf]
  %v28 = vld [vmem:[%s0 + $0x34] sm:$0xf]
  %v29 = vld [vmem:[%s0 + $0x38] sm:$0xf]
  %v30 = vld [vmem:[%s0 + $0x3c] sm:$0xf]
  %v31 = vld [vmem:[%s1] sm:$0xf]
  %v32 = vld [vmem:[%s1 + $0x4] sm:$0xf]
  %v33 = vld [vmem:[%s1 + $0x8] sm:$0xf]
  %v34 = vld [vmem:[%s1 + $0xc] sm:$0xf]
  %v35 = vld [vmem:[%s2] sm:$0xff]
  %v36 = vld [vmem:[%s2 + $0x8] sm:$0xff]
  %v37 = vld [vmem:[%s2 + $0x10] sm:$0xff]
  %v38 = vld [vmem:[%s2 + $0x18] sm:$0xff]
  %40 = vset.pattern.permute.xlu0 0
  %41 = vperm.xlu0 %40, %v35
  %v42 = vpop.permute.xlu0 %41
  %45 = vset.pattern.permute.xlu0 0
  %46 = vperm.xlu0 %45, %v36
  %v47 = vpop.permute.xlu0 %46
  %50 = vset.pattern.permute.xlu0 0
  %51 = vperm.xlu0 %50, %v37
  %v52 = vpop.permute.xlu0 %51
  %55 = vset.pattern.permute.xlu0 0
  %56 = vperm.xlu0 %55, %v38
  %v57 = vpop.permute.xlu0 %56
  %v63 = vunpack.c.l.b16 %v31
  %v64 = vunpack.c.l.b16 %v32
  %v65 = vunpack.c.l.b16 %v33
  %v66 = vunpack.c.l.b16 %v34
  %v67 = vpack.c.b16 %v64, %v63
  %v68 = vpack.c.b16 %v66, %v65
  %v85 = vunpack.c.l.b16 %v15
  %v86 = vunpack.c.l.b16 %v16
  %v87 = vunpack.c.l.b16 %v17
  %v88 = vunpack.c.l.b16 %v18
  %v89 = vunpack.c.l.b16 %v19
  %v90 = vunpack.c.l.b16 %v20
  %v91 = vunpack.c.l.b16 %v21
  %v92 = vunpack.c.l.b16 %v22
  %v93 = vunpack.c.l.b16 %v23
  %v94 = vunpack.c.l.b16 %v24
  %v95 = vunpack.c.l.b16 %v25
  %v96 = vunpack.c.l.b16 %v26
  %v97 = vunpack.c.l.b16 %v27
  %v98 = vunpack.c.l.b16 %v28
  %v99 = vunpack.c.l.b16 %v29
  %v100 = vunpack.c.l.b16 %v30
  %v101 = vpack.c.b16 %v86, %v85
  %v102 = vpack.c.b16 %v88, %v87
  %v103 = vpack.c.b16 %v90, %v89
  %v104 = vpack.c.b16 %v92, %v91
  %v105 = vpack.c.b16 %v94, %v93
  %v106 = vpack.c.b16 %v96, %v95
  %v107 = vpack.c.b16 %v98, %v97
  %v108 = vpack.c.b16 %v100, %v99
  %vm109 = vcmask 261120
  %v111 = vsel %vm109, %v67, 0
  %v114 = vsel %vm109, %v68, 0
  %v117 = vsel %vm109, %v101, 0
  %v120 = vsel %vm109, %v102, 0
  %v123 = vsel %vm109, %v103, 0
  %v126 = vsel %vm109, %v104, 0
  %v129 = vsel %vm109, %v105, 0
  %v132 = vsel %vm109, %v106, 0
  %v135 = vsel %vm109, %v107, 0
  %v138 = vsel %vm109, %v108, 0
  %140 = vmatprep.subr.bf16.mxu0 0
  %141 = vmatpush1.bf16.xpose.msra.mxu0 %v138
  %142 = vmatprep.subr.bf16.mxu0 0
  %143 = vmatpush1.bf16.xpose.msra.mxu0 %v135
  %144 = vmatprep.subr.bf16.mxu0 0
  %145 = vmatpush1.bf16.xpose.msra.mxu0 %v132
  %146 = vmatprep.subr.bf16.mxu0 0
  %147 = vmatpush1.bf16.xpose.msra.mxu0 %v129
  %148 = vmatprep.subr.bf16.mxu0 0
  %149 = vmatpush1.bf16.xpose.msra.mxu0 %v126
  %150 = vmatprep.subr.bf16.mxu0 0
  %151 = vmatpush1.bf16.xpose.msra.mxu0 %v123
  %152 = vmatprep.subr.bf16.mxu0 0
  %153 = vmatpush1.bf16.xpose.msra.mxu0 %v120
  %154 = vmatprep.subr.bf16.mxu0 0
  %155 = vmatpush1.bf16.xpose.msra.mxu0 %v117
  %156 = vmatprep.subr.bf16.mxu0 0
  %157 = vmatpush2.bf16.xpose.msra.mxu0 0
  %158 = vmatprep.subr.bf16.mxu0 0
  %159 = vmatpush2.bf16.xpose.msra.mxu0 0
  %160 = vmatprep.subr.bf16.mxu0 0
  %161 = vmatpush2.bf16.xpose.msra.mxu0 0
  %162 = vmatprep.subr.bf16.mxu0 0
  %163 = vmatpush2.bf16.xpose.msra.mxu0 0
  %164 = vmatprep.subr.bf16.mxu0 0
  %165 = vmatpush2.bf16.xpose.msra.mxu0 0
  %166 = vmatprep.subr.bf16.mxu0 0
  %167 = vmatpush2.bf16.xpose.msra.mxu0 0
  %168 = vmatprep.subr.bf16.mxu0 0
  %169 = vmatpush2.bf16.xpose.msra.mxu0 0
  %170 = vmatprep.subr.bf16.mxu0 0
  %171 = vmatpush2.bf16.xpose.msra.mxu0 0
  %172 = vmatprep.mubr.bf16.mxu0 0
  %173 = vmatmul.mubr.bf16.gmra.mxu0 %v111
  %v174 = vpop.f32.mrf.mxu0
  %v175 = vadd.f32 %v42, %v174
  %v176 = vpop.f32.mrf.mxu0
  %v177 = vpop.f32.mrf.mxu0
  %v178 = vadd.f32 %v47, %v177
  %v179 = vpop.f32.mrf.mxu0
  %180 = vmatprep.mubr.bf16.mxu0 0
  %181 = vmatmul.mubr.bf16.gmra.mxu0 %v114
  %v182 = vpop.f32.mrf.mxu0
  %v183 = vadd.f32 %v52, %v182
  %v184 = vpop.f32.mrf.mxu0
  %v185 = vpop.f32.mrf.mxu0
  %v186 = vadd.f32 %v57, %v185
  %v187 = vpop.f32.mrf.mxu0
  %188 = vdwg.mxu0
  %v189 = vtanh.pop %v175
  %v190 = vtanh.pop %v178
  %v191 = vtanh.pop %v183
  %v192 = vtanh.pop %v186
  %s193 = scalar_lea.vmem %s1, 16
  %v194 = vld [vmem:[%s193] sm:$0xf]
  %v195 = vld [vmem:[%s193 + $0x4] sm:$0xf]
  %v196 = vld [vmem:[%s193 + $0x8] sm:$0xf]
  %v197 = vld [vmem:[%s193 + $0xc] sm:$0xf]
  %v198 = vpack.c.bf16 %v190, %v189
  %v199 = vpack.c.bf16 %v192, %v191
  %s200 = scalar_lea.vmem %s2, 32
  %v201 = vld [vmem:[%s200] sm:$0xff]
  %v202 = vld [vmem:[%s200 + $0x8] sm:$0xff]
  %v203 = vld [vmem:[%s200 + $0x10] sm:$0xff]
  %v204 = vld [vmem:[%s200 + $0x18] sm:$0xff]
  %206 = vset.pattern.permute.xlu0 0
  %207 = vperm.xlu0 %206, %v201
  %v208 = vpop.permute.xlu0 %207
  %211 = vset.pattern.permute.xlu0 0
  %212 = vperm.xlu0 %211, %v202
  %v213 = vpop.permute.xlu0 %212
  %216 = vset.pattern.permute.xlu0 0
  %217 = vperm.xlu0 %216, %v203
  %v218 = vpop.permute.xlu0 %217
  %221 = vset.pattern.permute.xlu0 0
  %222 = vperm.xlu0 %221, %v204
  %v223 = vpop.permute.xlu0 %222
  %v229 = vunpack.c.l.b16 %v194
  %v230 = vunpack.c.l.b16 %v195
  %v231 = vunpack.c.l.b16 %v196
  %v232 = vunpack.c.l.b16 %v197
  %v233 = vpack.c.b16 %v230, %v229
  %v234 = vpack.c.b16 %v232, %v231
  %v236 = vsel %vm109, %v233, 0
  %v239 = vsel %vm109, %v234, 0
  %241 = vmatprep.subr.bf16.mxu0 0
  %242 = vmatpush1.bf16.msra.mxu0 0
  %243 = vmatprep.subr.bf16.mxu0 0
  %244 = vmatpush1.bf16.msra.mxu0 0
  %245 = vmatprep.subr.bf16.mxu0 0
  %246 = vmatpush1.bf16.msra.mxu0 0
  %247 = vmatprep.subr.bf16.mxu0 0
  %248 = vmatpush1.bf16.msra.mxu0 0
  %249 = vmatprep.subr.bf16.mxu0 0
  %250 = vmatpush1.bf16.msra.mxu0 0
  %251 = vmatprep.subr.bf16.mxu0 0
  %252 = vmatpush1.bf16.msra.mxu0 0
  %253 = vmatprep.subr.bf16.mxu0 0
  %254 = vmatpush1.bf16.msra.mxu0 %v199
  %255 = vmatprep.subr.bf16.mxu0 0
  %256 = vmatpush1.bf16.msra.mxu0 %v198
  %257 = vmatprep.subr.bf16.mxu0 0
  %258 = vmatpush2.bf16.msra.mxu0 0
  %259 = vmatprep.subr.bf16.mxu0 0
  %260 = vmatpush2.bf16.msra.mxu0 0
  %261 = vmatprep.subr.bf16.mxu0 0
  %262 = vmatpush2.bf16.msra.mxu0 0
  %263 = vmatprep.subr.bf16.mxu0 0
  %264 = vmatpush2.bf16.msra.mxu0 0
  %265 = vmatprep.subr.bf16.mxu0 0
  %266 = vmatpush2.bf16.msra.mxu0 0
  %267 = vmatprep.subr.bf16.mxu0 0
  %268 = vmatpush2.bf16.msra.mxu0 0
  %269 = vmatprep.subr.bf16.mxu0 0
  %270 = vmatpush2.bf16.msra.mxu0 0
  %271 = vmatprep.subr.bf16.mxu0 0
  %272 = vmatpush2.bf16.msra.mxu0 0
  %273 = vmatprep.mubr.bf16.mxu0 0
  %274 = vmatmul.mubr.bf16.gmra.mxu0 %v236
  %v275 = vpop.f32.mrf.mxu0
  %v276 = vadd.f32 %v208, %v275
  %v277 = vpop.f32.mrf.mxu0
  %v278 = vpop.f32.mrf.mxu0
  %v279 = vadd.f32 %v213, %v278
  %v280 = vpop.f32.mrf.mxu0
  %281 = vmatprep.mubr.bf16.mxu0 0
  %282 = vmatmul.mubr.bf16.gmra.mxu0 %v239
  %v283 = vpop.f32.mrf.mxu0
  %v284 = vadd.f32 %v218, %v283
  %v285 = vpop.f32.mrf.mxu0
  %v286 = vpop.f32.mrf.mxu0
  %v287 = vadd.f32 %v223, %v286
  %v288 = vpop.f32.mrf.mxu0
  %289 = vdwg.mxu0
  %v290 = vtanh.pop %v276
  %v291 = vtanh.pop %v279
  %v292 = vtanh.pop %v284
  %v293 = vtanh.pop %v287
  %s294 = scalar_lea.vmem %s1, 32
  %v295 = vld [vmem:[%s294] sm:$0xf]
  %v296 = vld [vmem:[%s294 + $0x4] sm:$0xf]
  %v297 = vld [vmem:[%s294 + $0x8] sm:$0xf]
  %v298 = vld [vmem:[%s294 + $0xc] sm:$0xf]
  %v299 = vpack.c.bf16 %v291, %v290
  %v300 = vpack.c.bf16 %v293, %v292
  %s301 = scalar_lea.vmem %s2, 64
  %v302 = vld [vmem:[%s301] sm:$0xff]
  %v303 = vld [vmem:[%s301 + $0x8] sm:$0xff]
  %v304 = vld [vmem:[%s301 + $0x10] sm:$0xff]
  %v305 = vld [vmem:[%s301 + $0x18] sm:$0xff]
  %307 = vset.pattern.permute.xlu0 0
  %308 = vperm.xlu0 %307, %v302
  %v309 = vpop.permute.xlu0 %308
  %312 = vset.pattern.permute.xlu0 0
  %313 = vperm.xlu0 %312, %v303
  %v314 = vpop.permute.xlu0 %313
  %317 = vset.pattern.permute.xlu0 0
  %318 = vperm.xlu0 %317, %v304
  %v319 = vpop.permute.xlu0 %318
  %322 = vset.pattern.permute.xlu0 0
  %323 = vperm.xlu0 %322, %v305
  %v324 = vpop.permute.xlu0 %323
  %v330 = vunpack.c.l.b16 %v295
  %v331 = vunpack.c.l.b16 %v296
  %v332 = vunpack.c.l.b16 %v297
  %v333 = vunpack.c.l.b16 %v298
  %v334 = vpack.c.b16 %v331, %v330
  %v335 = vpack.c.b16 %v333, %v332
  %v337 = vsel %vm109, %v334, 0
  %v340 = vsel %vm109, %v335, 0
  %342 = vmatprep.subr.bf16.mxu0 0
  %343 = vmatpush1.bf16.msra.mxu0 0
  %344 = vmatprep.subr.bf16.mxu0 0
  %345 = vmatpush1.bf16.msra.mxu0 0
  %346 = vmatprep.subr.bf16.mxu0 0
  %347 = vmatpush1.bf16.msra.mxu0 0
  %348 = vmatprep.subr.bf16.mxu0 0
  %349 = vmatpush1.bf16.msra.mxu0 0
  %350 = vmatprep.subr.bf16.mxu0 0
  %351 = vmatpush1.bf16.msra.mxu0 0
  %352 = vmatprep.subr.bf16.mxu0 0
  %353 = vmatpush1.bf16.msra.mxu0 0
  %354 = vmatprep.subr.bf16.mxu0 0
  %355 = vmatpush1.bf16.msra.mxu0 %v300
  %356 = vmatprep.subr.bf16.mxu0 0
  %357 = vmatpush1.bf16.msra.mxu0 %v299
  %358 = vmatprep.subr.bf16.mxu0 0
  %359 = vmatpush2.bf16.msra.mxu0 0
  %360 = vmatprep.subr.bf16.mxu0 0
  %361 = vmatpush2.bf16.msra.mxu0 0
  %362 = vmatprep.subr.bf16.mxu0 0
  %363 = vmatpush2.bf16.msra.mxu0 0
  %364 = vmatprep.subr.bf16.mxu0 0
  %365 = vmatpush2.bf16.msra.mxu0 0
  %366 = vmatprep.subr.bf16.mxu0 0
  %367 = vmatpush2.bf16.msra.mxu0 0
  %368 = vmatprep.subr.bf16.mxu0 0
  %369 = vmatpush2.bf16.msra.mxu0 0
  %370 = vmatprep.subr.bf16.mxu0 0
  %371 = vmatpush2.bf16.msra.mxu0 0
  %372 = vmatprep.subr.bf16.mxu0 0
  %373 = vmatpush2.bf16.msra.mxu0 0
  %374 = vmatprep.mubr.bf16.mxu0 0
  %375 = vmatmul.mubr.bf16.gmra.mxu0 %v337
  %v376 = vpop.f32.mrf.mxu0
  %v377 = vadd.f32 %v309, %v376
  %v378 = vpop.f32.mrf.mxu0
  %v379 = vpop.f32.mrf.mxu0
  %v380 = vadd.f32 %v314, %v379
  %v381 = vpop.f32.mrf.mxu0
  %382 = vmatprep.mubr.bf16.mxu0 0
  %383 = vmatmul.mubr.bf16.gmra.mxu0 %v340
  %v384 = vpop.f32.mrf.mxu0
  %v385 = vadd.f32 %v319, %v384
  %v386 = vpop.f32.mrf.mxu0
  %v387 = vpop.f32.mrf.mxu0
  %v388 = vadd.f32 %v324, %v387
  %v389 = vpop.f32.mrf.mxu0
  %390 = vdwg.mxu0
  %v391 = vtanh.pop %v377
  %v392 = vtanh.pop %v380
  %v393 = vtanh.pop %v385
  %v394 = vtanh.pop %v388
  %s395 = scalar_lea.vmem %s1, 48
  %v396 = vld [vmem:[%s395] sm:$0xf]
  %v397 = vld [vmem:[%s395 + $0x4] sm:$0xf]
  %v398 = vld [vmem:[%s395 + $0x8] sm:$0xf]
  %v399 = vld [vmem:[%s395 + $0xc] sm:$0xf]
  %v400 = vpack.c.bf16 %v392, %v391
  %v401 = vpack.c.bf16 %v394, %v393
  %s402 = scalar_lea.vmem %s2, 96
  %v403 = vld [vmem:[%s402] sm:$0xff]
  %v404 = vld [vmem:[%s402 + $0x8] sm:$0xff]
  %v405 = vld [vmem:[%s402 + $0x10] sm:$0xff]
  %v406 = vld [vmem:[%s402 + $0x18] sm:$0xff]
  %408 = vset.pattern.permute.xlu0 0
  %409 = vperm.xlu0 %408, %v403
  %v410 = vpop.permute.xlu0 %409
  %413 = vset.pattern.permute.xlu0 0
  %414 = vperm.xlu0 %413, %v404
  %v415 = vpop.permute.xlu0 %414
  %418 = vset.pattern.permute.xlu0 0
  %419 = vperm.xlu0 %418, %v405
  %v420 = vpop.permute.xlu0 %419
  %423 = vset.pattern.permute.xlu0 0
  %424 = vperm.xlu0 %423, %v406
  %v425 = vpop.permute.xlu0 %424
  %v431 = vunpack.c.l.b16 %v396
  %v432 = vunpack.c.l.b16 %v397
  %v433 = vunpack.c.l.b16 %v398
  %v434 = vunpack.c.l.b16 %v399
  %v435 = vpack.c.b16 %v432, %v431
  %v436 = vpack.c.b16 %v434, %v433
  %v438 = vsel %vm109, %v435, 0
  %v441 = vsel %vm109, %v436, 0
  %443 = vmatprep.subr.bf16.mxu0 0
  %444 = vmatpush1.bf16.msra.mxu0 0
  %445 = vmatprep.subr.bf16.mxu0 0
  %446 = vmatpush1.bf16.msra.mxu0 0
  %447 = vmatprep.subr.bf16.mxu0 0
  %448 = vmatpush1.bf16.msra.mxu0 0
  %449 = vmatprep.subr.bf16.mxu0 0
  %450 = vmatpush1.bf16.msra.mxu0 0
  %451 = vmatprep.subr.bf16.mxu0 0
  %452 = vmatpush1.bf16.msra.mxu0 0
  %453 = vmatprep.subr.bf16.mxu0 0
  %454 = vmatpush1.bf16.msra.mxu0 0
  %455 = vmatprep.subr.bf16.mxu0 0
  %456 = vmatpush1.bf16.msra.mxu0 %v401
  %457 = vmatprep.subr.bf16.mxu0 0
  %458 = vmatpush1.bf16.msra.mxu0 %v400
  %459 = vmatprep.subr.bf16.mxu0 0
  %460 = vmatpush2.bf16.msra.mxu0 0
  %461 = vmatprep.subr.bf16.mxu0 0
  %462 = vmatpush2.bf16.msra.mxu0 0
  %463 = vmatprep.subr.bf16.mxu0 0
  %464 = vmatpush2.bf16.msra.mxu0 0
  %465 = vmatprep.subr.bf16.mxu0 0
  %466 = vmatpush2.bf16.msra.mxu0 0
  %467 = vmatprep.subr.bf16.mxu0 0
  %468 = vmatpush2.bf16.msra.mxu0 0
  %469 = vmatprep.subr.bf16.mxu0 0
  %470 = vmatpush2.bf16.msra.mxu0 0
  %471 = vmatprep.subr.bf16.mxu0 0
  %472 = vmatpush2.bf16.msra.mxu0 0
  %473 = vmatprep.subr.bf16.mxu0 0
  %474 = vmatpush2.bf16.msra.mxu0 0
  %475 = vmatprep.mubr.bf16.mxu0 0
  %476 = vmatmul.mubr.bf16.gmra.mxu0 %v438
  %v477 = vpop.f32.mrf.mxu0
  %v478 = vadd.f32 %v410, %v477
  %v479 = vpop.f32.mrf.mxu0
  %v480 = vpop.f32.mrf.mxu0
  %v481 = vadd.f32 %v415, %v480
  %v482 = vpop.f32.mrf.mxu0
  %483 = vmatprep.mubr.bf16.mxu0 0
  %484 = vmatmul.mubr.bf16.gmra.mxu0 %v441
  %v485 = vpop.f32.mrf.mxu0
  %v486 = vadd.f32 %v420, %v485
  %v487 = vpop.f32.mrf.mxu0
  %v488 = vpop.f32.mrf.mxu0
  %v489 = vadd.f32 %v425, %v488
  %v490 = vpop.f32.mrf.mxu0
  %491 = vdwg.mxu0
  %v492 = vtanh.pop %v478
  %v493 = vtanh.pop %v481
  %v494 = vtanh.pop %v486
  %v495 = vtanh.pop %v489
  %s496 = scalar_lea.vmem %s1, 64
  %v497 = vld [vmem:[%s496] sm:$0xf]
  %v498 = vld [vmem:[%s496 + $0x4] sm:$0xf]
  %v499 = vld [vmem:[%s496 + $0x8] sm:$0xf]
  %v500 = vld [vmem:[%s496 + $0xc] sm:$0xf]
  %v501 = vpack.c.bf16 %v493, %v492
  %v502 = vpack.c.bf16 %v495, %v494
  %s503 = scalar_lea.vmem %s2, 128
  %v504 = vld [vmem:[%s503] sm:$0xff]
  %v505 = vld [vmem:[%s503 + $0x8] sm:$0xff]
  %v506 = vld [vmem:[%s503 + $0x10] sm:$0xff]
  %v507 = vld [vmem:[%s503 + $0x18] sm:$0xff]
  %509 = vset.pattern.permute.xlu0 0
  %510 = vperm.xlu0 %509, %v504
  %v511 = vpop.permute.xlu0 %510
  %514 = vset.pattern.permute.xlu0 0
  %515 = vperm.xlu0 %514, %v505
  %v516 = vpop.permute.xlu0 %515
  %519 = vset.pattern.permute.xlu0 0
  %520 = vperm.xlu0 %519, %v506
  %v521 = vpop.permute.xlu0 %520
  %524 = vset.pattern.permute.xlu0 0
  %525 = vperm.xlu0 %524, %v507
  %v526 = vpop.permute.xlu0 %525
  %v532 = vunpack.c.l.b16 %v497
  %v533 = vunpack.c.l.b16 %v498
  %v534 = vunpack.c.l.b16 %v499
  %v535 = vunpack.c.l.b16 %v500
  %v536 = vpack.c.b16 %v533, %v532
  %v537 = vpack.c.b16 %v535, %v534
  %v539 = vsel %vm109, %v536, 0
  %v542 = vsel %vm109, %v537, 0
  %544 = vmatprep.subr.bf16.mxu0 0
  %545 = vmatpush1.bf16.msra.mxu0 0
  %546 = vmatprep.subr.bf16.mxu0 0
  %547 = vmatpush1.bf16.msra.mxu0 0
  %548 = vmatprep.subr.bf16.mxu0 0
  %549 = vmatpush1.bf16.msra.mxu0 0
  %550 = vmatprep.subr.bf16.mxu0 0
  %551 = vmatpush1.bf16.msra.mxu0 0
  %552 = vmatprep.subr.bf16.mxu0 0
  %553 = vmatpush1.bf16.msra.mxu0 0
  %554 = vmatprep.subr.bf16.mxu0 0
  %555 = vmatpush1.bf16.msra.mxu0 0
  %556 = vmatprep.subr.bf16.mxu0 0
  %557 = vmatpush1.bf16.msra.mxu0 %v502
  %558 = vmatprep.subr.bf16.mxu0 0
  %559 = vmatpush1.bf16.msra.mxu0 %v501
  %560 = vmatprep.subr.bf16.mxu0 0
  %561 = vmatpush2.bf16.msra.mxu0 0
  %562 = vmatprep.subr.bf16.mxu0 0
  %563 = vmatpush2.bf16.msra.mxu0 0
  %564 = vmatprep.subr.bf16.mxu0 0
  %565 = vmatpush2.bf16.msra.mxu0 0
  %566 = vmatprep.subr.bf16.mxu0 0
  %567 = vmatpush2.bf16.msra.mxu0 0
  %568 = vmatprep.subr.bf16.mxu0 0
  %569 = vmatpush2.bf16.msra.mxu0 0
  %570 = vmatprep.subr.bf16.mxu0 0
  %571 = vmatpush2.bf16.msra.mxu0 0
  %572 = vmatprep.subr.bf16.mxu0 0
  %573 = vmatpush2.bf16.msra.mxu0 0
  %574 = vmatprep.subr.bf16.mxu0 0
  %575 = vmatpush2.bf16.msra.mxu0 0
  %576 = vmatprep.mubr.bf16.mxu0 0
  %577 = vmatmul.mubr.bf16.gmra.mxu0 %v539
  %v578 = vpop.f32.mrf.mxu0
  %v579 = vadd.f32 %v511, %v578
  %v580 = vpop.f32.mrf.mxu0
  %v581 = vpop.f32.mrf.mxu0
  %v582 = vadd.f32 %v516, %v581
  %v583 = vpop.f32.mrf.mxu0
  %584 = vmatprep.mubr.bf16.mxu0 0
  %585 = vmatmul.mubr.bf16.gmra.mxu0 %v542
  %v586 = vpop.f32.mrf.mxu0
  %v587 = vadd.f32 %v521, %v586
  %v588 = vpop.f32.mrf.mxu0
  %v589 = vpop.f32.mrf.mxu0
  %v590 = vadd.f32 %v526, %v589
  %v591 = vpop.f32.mrf.mxu0
  %592 = vdwg.mxu0
  %v593 = vtanh.pop %v579
  %v594 = vtanh.pop %v582
  %v595 = vtanh.pop %v587
  %v596 = vtanh.pop %v590
  %s597 = scalar_lea.vmem %s1, 80
  %v598 = vld [vmem:[%s597] sm:$0xf]
  %v599 = vld [vmem:[%s597 + $0x4] sm:$0xf]
  %v600 = vld [vmem:[%s597 + $0x8] sm:$0xf]
  %v601 = vld [vmem:[%s597 + $0xc] sm:$0xf]
  %v602 = vpack.c.bf16 %v594, %v593
  %v603 = vpack.c.bf16 %v596, %v595
  %s604 = scalar_lea.vmem %s2, 160
  %v605 = vld [vmem:[%s604] sm:$0xff]
  %v606 = vld [vmem:[%s604 + $0x8] sm:$0xff]
  %v607 = vld [vmem:[%s604 + $0x10] sm:$0xff]
  %v608 = vld [vmem:[%s604 + $0x18] sm:$0xff]
  %610 = vset.pattern.permute.xlu0 0
  %611 = vperm.xlu0 %610, %v605
  %v612 = vpop.permute.xlu0 %611
  %615 = vset.pattern.permute.xlu0 0
  %616 = vperm.xlu0 %615, %v606
  %v617 = vpop.permute.xlu0 %616
  %620 = vset.pattern.permute.xlu0 0
  %621 = vperm.xlu0 %620, %v607
  %v622 = vpop.permute.xlu0 %621
  %625 = vset.pattern.permute.xlu0 0
  %626 = vperm.xlu0 %625, %v608
  %v627 = vpop.permute.xlu0 %626
  %v633 = vunpack.c.l.b16 %v598
  %v634 = vunpack.c.l.b16 %v599
  %v635 = vunpack.c.l.b16 %v600
  %v636 = vunpack.c.l.b16 %v601
  %v637 = vpack.c.b16 %v634, %v633
  %v638 = vpack.c.b16 %v636, %v635
  %v640 = vsel %vm109, %v637, 0
  %v643 = vsel %vm109, %v638, 0
  %645 = vmatprep.subr.bf16.mxu0 0
  %646 = vmatpush1.bf16.msra.mxu0 0
  %647 = vmatprep.subr.bf16.mxu0 0
  %648 = vmatpush1.bf16.msra.mxu0 0
  %649 = vmatprep.subr.bf16.mxu0 0
  %650 = vmatpush1.bf16.msra.mxu0 0
  %651 = vmatprep.subr.bf16.mxu0 0
  %652 = vmatpush1.bf16.msra.mxu0 0
  %653 = vmatprep.subr.bf16.mxu0 0
  %654 = vmatpush1.bf16.msra.mxu0 0
  %655 = vmatprep.subr.bf16.mxu0 0
  %656 = vmatpush1.bf16.msra.mxu0 0
  %657 = vmatprep.subr.bf16.mxu0 0
  %658 = vmatpush1.bf16.msra.mxu0 %v603
  %659 = vmatprep.subr.bf16.mxu0 0
  %660 = vmatpush1.bf16.msra.mxu0 %v602
  %661 = vmatprep.subr.bf16.mxu0 0
  %662 = vmatpush2.bf16.msra.mxu0 0
  %663 = vmatprep.subr.bf16.mxu0 0
  %664 = vmatpush2.bf16.msra.mxu0 0
  %665 = vmatprep.subr.bf16.mxu0 0
  %666 = vmatpush2.bf16.msra.mxu0 0
  %667 = vmatprep.subr.bf16.mxu0 0
  %668 = vmatpush2.bf16.msra.mxu0 0
  %669 = vmatprep.subr.bf16.mxu0 0
  %670 = vmatpush2.bf16.msra.mxu0 0
  %671 = vmatprep.subr.bf16.mxu0 0
  %672 = vmatpush2.bf16.msra.mxu0 0
  %673 = vmatprep.subr.bf16.mxu0 0
  %674 = vmatpush2.bf16.msra.mxu0 0
  %675 = vmatprep.subr.bf16.mxu0 0
  %676 = vmatpush2.bf16.msra.mxu0 0
  %677 = vmatprep.mubr.bf16.mxu0 0
  %678 = vmatmul.mubr.bf16.gmra.mxu0 %v640
  %v679 = vpop.f32.mrf.mxu0
  %v680 = vadd.f32 %v612, %v679
  %v681 = vpop.f32.mrf.mxu0
  %v682 = vpop.f32.mrf.mxu0
  %v683 = vadd.f32 %v617, %v682
  %v684 = vpop.f32.mrf.mxu0
  %685 = vmatprep.mubr.bf16.mxu0 0
  %686 = vmatmul.mubr.bf16.gmra.mxu0 %v643
  %v687 = vpop.f32.mrf.mxu0
  %v688 = vadd.f32 %v622, %v687
  %v689 = vpop.f32.mrf.mxu0
  %v690 = vpop.f32.mrf.mxu0
  %v691 = vadd.f32 %v627, %v690
  %v692 = vpop.f32.mrf.mxu0
  %693 = vdwg.mxu0
  %v694 = vtanh.pop %v680
  %v695 = vtanh.pop %v683
  %v696 = vtanh.pop %v688
  %v697 = vtanh.pop %v691
  %698 = vxpose.xlu0.b32.start [1/16] %v694, 128
  %699 = vxpose.xlu0.b32.cont [2/16] %v695, 128
  %700 = vxpose.xlu0.b32.cont [3/16] %v696, 128
  %701 = vxpose.xlu0.b32.cont [4/16] %v697, 128
  %702 = vxpose.xlu0.b32.cont [5/16] 0.0, 128
  %703 = vxpose.xlu0.b32.cont [6/16] 0.0, 128
  %704 = vxpose.xlu0.b32.cont [7/16] 0.0, 128
  %705 = vxpose.xlu0.b32.cont [8/16] 0.0, 128
  %706 = vxpose.xlu0.b32.cont [9/16] 0.0, 128
  %707 = vxpose.xlu0.b32.cont [10/16] 0.0, 128
  %708 = vxpose.xlu0.b32.cont [11/16] 0.0, 128
  %709 = vxpose.xlu0.b32.cont [12/16] 0.0, 128
  %710 = vxpose.xlu0.b32.cont [13/16] 0.0, 128
  %711 = vxpose.xlu0.b32.cont [14/16] 0.0, 128
  %712 = vxpose.xlu0.b32.cont [15/16] 0.0, 128
  %713 = vxpose.xlu0.b32.end [16/16] 0.0, 128
  %v714 = vpop.trf.xlu0
  %v715 = vpop.trf.xlu0
  %v716 = vpop.trf.xlu0
  %v717 = vpop.trf.xlu0
  %v718 = vpop.trf.xlu0
  %v719 = vpop.trf.xlu0
  %v720 = vpop.trf.xlu0
  %v721 = vpop.trf.xlu0
  %v722 = vpop.trf.xlu0
  %v723 = vpop.trf.xlu0
  %v724 = vpop.trf.xlu0
  %v725 = vpop.trf.xlu0
  %v726 = vpop.trf.xlu0
  %v727 = vpop.trf.xlu0
  %v728 = vpop.trf.xlu0
  %v729 = vpop.trf.xlu0
  %v730 = vpack.c.bf16 %v715, %v714
  %v731 = vpack.c.bf16 %v717, %v716
  %v732 = vpack.c.bf16 %v719, %v718
  %v733 = vpack.c.bf16 %v721, %v720
  %v734 = vpack.c.bf16 %v723, %v722
  %v735 = vpack.c.bf16 %v725, %v724
  %v736 = vpack.c.bf16 %v727, %v726
  %v737 = vpack.c.bf16 %v729, %v728
  %v746 = vunpack.c.l.b16 %v730
  %v747 = vunpack.c.h.b16 %v730
  %v748 = vunpack.c.l.b16 %v731
  %v749 = vunpack.c.h.b16 %v731
  %v750 = vunpack.c.l.b16 %v732
  %v751 = vunpack.c.h.b16 %v732
  %v752 = vunpack.c.l.b16 %v733
  %v753 = vunpack.c.h.b16 %v733
  %v754 = vunpack.c.l.b16 %v734
  %v755 = vunpack.c.h.b16 %v734
  %v756 = vunpack.c.l.b16 %v735
  %v757 = vunpack.c.h.b16 %v735
  %v758 = vunpack.c.l.b16 %v736
  %v759 = vunpack.c.h.b16 %v736
  %v760 = vunpack.c.l.b16 %v737
  %v761 = vunpack.c.h.b16 %v737
  %v762 = vpack.c.b16 %v746, %v746
  %v763 = vpack.c.b16 %v747, %v747
  %v764 = vpack.c.b16 %v748, %v748
  %v765 = vpack.c.b16 %v749, %v749
  %v766 = vpack.c.b16 %v750, %v750
  %v767 = vpack.c.b16 %v751, %v751
  %v768 = vpack.c.b16 %v752, %v752
  %v769 = vpack.c.b16 %v753, %v753
  %v770 = vpack.c.b16 %v754, %v754
  %v771 = vpack.c.b16 %v755, %v755
  %v772 = vpack.c.b16 %v756, %v756
  %v773 = vpack.c.b16 %v757, %v757
  %v774 = vpack.c.b16 %v758, %v758
  %v775 = vpack.c.b16 %v759, %v759
  %v776 = vpack.c.b16 %v760, %v760
  %v777 = vpack.c.b16 %v761, %v761
  %vm794 = vcmask 257024
  %795 = vst.msk [vmem:[%s3] sm:$0xf] %vm794, %v762
  %796 = vst.msk [vmem:[%s3 + $0x4] sm:$0xf] %vm794, %v763
  %797 = vst.msk [vmem:[%s3 + $0x8] sm:$0xf] %vm794, %v764
  %798 = vst.msk [vmem:[%s3 + $0xc] sm:$0xf] %vm794, %v765
  %799 = vst.msk [vmem:[%s3 + $0x10] sm:$0xf] %vm794, %v766
  %800 = vst.msk [vmem:[%s3 + $0x14] sm:$0xf] %vm794, %v767
  %801 = vst.msk [vmem:[%s3 + $0x18] sm:$0xf] %vm794, %v768
  %802 = vst.msk [vmem:[%s3 + $0x1c] sm:$0xf] %vm794, %v769
  %803 = vst.msk [vmem:[%s3 + $0x20] sm:$0xf] %vm794, %v770
  %804 = vst.msk [vmem:[%s3 + $0x24] sm:$0xf] %vm794, %v771
  %805 = vst.msk [vmem:[%s3 + $0x28] sm:$0xf] %vm794, %v772
  %806 = vst.msk [vmem:[%s3 + $0x2c] sm:$0xf] %vm794, %v773
  %807 = vst.msk [vmem:[%s3 + $0x30] sm:$0xf] %vm794, %v774
  %808 = vst.msk [vmem:[%s3 + $0x34] sm:$0xf] %vm794, %v775
  %809 = vst.msk [vmem:[%s3 + $0x38] sm:$0xf] %vm794, %v776
  %810 = vst.msk [vmem:[%s3 + $0x3c] sm:$0xf] %vm794, %v777
  // Predicated region
  $region14: #{caenet_forward.1} parent=0 // pred_check
    _
  $region15: #{caenet_forward.1} parent=0 // pred_check_branch
    %812 = sbr.rel (0) target = $region17
  $region16: #{caenet_forward.1} parent=0 // pred_region
    _
  $region17: #{caenet_forward.1} parent=0 // pred_fallthru
    _
  // Predicated region
  $region18: #{caenet_forward.1} parent=0 // pred_check
    _
  $region19: #{caenet_forward.1} parent=0 // pred_check_branch
    %814 = sbr.rel (0) target = $region21
  $region20: #{caenet_forward.1} parent=0 // pred_region
    _
  $region21: #{caenet_forward.1} parent=0 // pred_fallthru
    _

</llo_original>
